<compile_context>
chip_gen: v7x
topology: tpu7x:2x2x1
jax: 0.10.0
libtpu: 0.0.40
codegen_flags: <defaults>
</compile_context>

<pallas_src>
import functools

import jax
import jax.numpy as jnp
from jax.experimental import pallas as pl
from jax.experimental.pallas import tpu as pltpu


def _round_up(n, m):
    return ((n + m - 1) // m) * m


def _batch_tiling(B, block_b, min_tiles):
    """Lane-dense batch tiling: tb is always a multiple of 128, padding waste
    is at most (n_tiles - 1) * 128 lanes, and we keep >= min_tiles grid steps
    (when the batch allows it) so v7x's two TensorCores both get work."""
    n128 = pl.cdiv(B, 128)                      # 128-lane groups covering B
    cap128 = max(int(block_b) // 128, 1)        # tile cap (multiple of 128)
    n_tiles = pl.cdiv(n128, cap128)
    n_tiles = min(max(n_tiles, int(min_tiles)), n128)
    tb = pl.cdiv(n128, n_tiles) * 128
    b_pad = n_tiles * tb
    return tb, b_pad, n_tiles


def corrected_hnn_kernel(xt_ref, w1_ref, b1_ref, w2_ref, b2_ref, w2t_ref,
                         w3_ref, a_ref, b3_ref, out_ref, *, h, dot_dtype):
    """One batch tile.  Batch lives on the lane axis.

    xt  : (D, TB)  f32        -- x^T tile (consumed by the VPU first layer)
    w1  : (H, D)   f32        -- PyTorch layout (out, in)
    b1  : (H, 1)   f32
    w2  : (H, H)   dot_dtype
    b2  : (H, 1)   f32
    w2t : (H, H)   dot_dtype  -- W2^T, pre-transposed on the host
    w3  : (H, 1)   f32        -- last-layer weight as a column
    a   : (H, H)   dot_dtype  -- W1_q @ W1_p^T (precomputed correction matrix)
    b3  : (1,)     f32 scalar in SMEM
    out : (1, TB)  f32        -- lane-dense row of corrected Hamiltonians
    """
    f32 = jnp.float32
    xt = xt_ref[...]
    b1 = b1_ref[...]
    b2 = b2_ref[...]
    w3 = w3_ref[...]

    D = xt_ref.shape[0]
    # ---- layer 1: K = D is tiny, run it on the VPU as unrolled broadcast-FMAs
    #      (keeps the MXU free for the H x H contractions, no weight swap) ----
    if D <= 16:
        z1 = b1 + w1_ref[:, 0:1] * xt[0:1, :]
        for k in range(1, D):
            z1 = z1 + w1_ref[:, k:k + 1] * xt[k:k + 1, :]
    else:  # generic fallback for large phase-space dims (f32 MXU matmul)
        z1 = jnp.dot(w1_ref[...], xt, preferred_element_type=f32) + b1
    a1 = jnp.tanh(z1)                                                   # (H, TB)

    # ---- layer 2 on the MXU; elementwise math stays f32 ----
    a2 = jnp.tanh(jnp.dot(w2_ref[...], a1.astype(dot_dtype),
                          preferred_element_type=f32) + b2)             # (H, TB)

    # H = w3 . a2 + b3  -- VPU multiply + reduce; reuse t2 = a2*w3 for g2.
    t2 = a2 * w3                                                        # (H, TB)
    ham = jnp.sum(t2, axis=0, keepdims=True) + b3_ref[0]                # (1, TB)

    # ---- analytic gradient (tanh' = 1 - tanh^2); (1-a2^2)*w3 == w3 - a2*t2 ----
    g2 = w3 - a2 * t2                                                   # (H, TB)
    g1 = jnp.dot(w2t_ref[...], g2.astype(dot_dtype),
                 preferred_element_type=f32) * (1.0 - a1 * a1)          # (H, TB)

    # <grad_q H, grad_p H> = g1^T (W1_q W1_p^T) g1, batched over lanes.
    ag1 = jnp.dot(a_ref[...], g1.astype(dot_dtype), preferred_element_type=f32)
    corr = jnp.sum(g1 * ag1, axis=0, keepdims=True)                     # (1, TB)

    out_ref[...] = (ham + (0.5 * h) * corr).astype(out_ref.dtype)


def corrected_hnn_forward(x, torch_params, h, *, block_b=4096, min_tiles=2,
                          dot_dtype=jnp.bfloat16):
    """CorrectedHNN.forward.  x: (B, D) f32 -> (B,) f32.

    torch_params are in PyTorch Linear layout:
      W1 (H, D), b1 (H,), W2 (H, H), b2 (H,), w3 (1, H), b3 (1,)
    """
    B, D = x.shape
    assert D % 2 == 0, "phase-space dimension must be even (q, p)"
    d = D // 2
    W1, b1, W2, b2, w3, b3 = torch_params
    H = W1.shape[0]

    tb, b_pad, n_tiles = _batch_tiling(B, block_b, min_tiles)
    grid = (n_tiles,)

    # x^T, f32 (layer 1 runs on the VPU), zero-padded on the batch/lane axis.
    # Single fused pad+transpose -- no full zero-slab write + scatter.
    xt = jnp.pad(x.astype(jnp.float32), ((0, b_pad - B), (0, 0))).T

    # Host-side weight prep (done once, outside the grid).
    a_mat = (W1[:, :d] @ W1[:, d:].T).astype(dot_dtype)                 # (H, H)
    w1_k = W1.astype(jnp.float32)                                       # VPU path
    w2_k = W2.astype(dot_dtype)
    w2t_k = W2.T.astype(dot_dtype)
    b1_k = b1.reshape(H, 1).astype(jnp.float32)
    b2_k = b2.reshape(H, 1).astype(jnp.float32)
    w3_k = w3.reshape(H, 1).astype(jnp.float32)
    b3_k = b3.reshape(1).astype(jnp.float32)

    const = lambda i: (0, 0)
    w_item = jnp.dtype(dot_dtype).itemsize
    cost = pl.CostEstimate(
        flops=2 * b_pad * (D * H + 3 * H * H),
        transcendentals=2 * b_pad * H,
        bytes_accessed=(D * b_pad * 4 + b_pad * 4
                        + D * H * 4 + 3 * H * H * w_item + 3 * H * 4 + 4),
    )

    # Footprint: ~8 (H, tb) f32 temporaries + double-buffered x^T/out tiles.
    # Only raise the scoped-VMEM limit if a huge block_b actually needs it
    # (v7x has 64 MiB physical / 32 MiB default scoped VMEM).
    vmem_est = (8 * H * tb * 4 + 2 * (D + 1) * tb * 4
                + 4 * H * H * w_item + (1 << 20))
    vmem_limit = int(vmem_est) if vmem_est > (28 << 20) else None

    kernel = functools.partial(corrected_hnn_kernel, h=float(h),
                               dot_dtype=dot_dtype)
    out = pl.pallas_call(
        kernel,
        out_shape=jax.ShapeDtypeStruct((1, b_pad), jnp.float32),
        grid=grid,
        in_specs=[
            pl.BlockSpec((D, tb), lambda i: (0, i)),             # x^T tile
            pl.BlockSpec((H, D), const),                         # W1 (f32)
            pl.BlockSpec((H, 1), const),                         # b1
            pl.BlockSpec((H, H), const),                         # W2
            pl.BlockSpec((H, 1), const),                         # b2
            pl.BlockSpec((H, H), const),                         # W2^T
            pl.BlockSpec((H, 1), const),                         # w3
            pl.BlockSpec((H, H), const),                         # A = W1_q W1_p^T
            pl.BlockSpec(memory_space=pltpu.MemorySpace.SMEM),   # b3 scalar
        ],
        out_specs=pl.BlockSpec((1, tb), lambda i: (0, i)),
        compiler_params=pltpu.CompilerParams(
            dimension_semantics=("parallel",),
            vmem_limit_bytes=vmem_limit),
        cost_estimate=cost,
    )(xt, w1_k, b1_k, w2_k, b2_k, w2t_k, w3_k, a_mat, b3_k)

    # HNN.forward does .squeeze(-1): corrected H per sample, shape (B,).
    return out[0, :B]


def reference_forward_f32(x, torch_params, h):
    """Pure-JAX f32 reference, original (un-rewritten) formulation."""
    W1, b1, W2, b2, w3, b3 = torch_params
    d = x.shape[1] // 2
    a1 = jnp.tanh(x @ W1.T + b1)
    a2 = jnp.tanh(a1 @ W2.T + b2)
    ham = (a2 @ w3.T)[:, 0] + b3[0]
    g2 = (1.0 - a2 * a2) * w3
    g1 = (g2 @ W2) * (1.0 - a1 * a1)
    grad_h = g1 @ W1
    corr = jnp.sum(grad_h[:, :d] * grad_h[:, d:], axis=-1)
    return ham + 0.5 * h * corr


def reference_forward_mirror(x, torch_params, h, dot_dtype):
    """Pure-JAX reference mirroring the kernel arithmetic (dtype + rewrite)."""
    W1, b1, W2, b2, w3, b3 = torch_params
    d = x.shape[1] // 2
    f32 = jnp.float32
    D = x.shape[1]
    xt = x.T.astype(f32)
    a_mat = (W1[:, :d] @ W1[:, d:].T).astype(dot_dtype)
    w3c = w3.reshape(-1, 1)
    # layer 1: same unrolled f32 FMA order as the kernel
    z1 = b1[:, None] + W1[:, 0:1] * xt[0:1, :]
    for k in range(1, D):
        z1 = z1 + W1[:, k:k + 1] * xt[k:k + 1, :]
    a1 = jnp.tanh(z1)
    a2 = jnp.tanh(jnp.dot(W2.astype(dot_dtype), a1.astype(dot_dtype),
                          preferred_element_type=f32) + b2[:, None])
    t2 = a2 * w3c
    ham = jnp.sum(t2, axis=0) + b3[0]
    g2 = w3c - a2 * t2
    g1 = jnp.dot(W2.T.astype(dot_dtype), g2.astype(dot_dtype),
                 preferred_element_type=f32) * (1.0 - a1 * a1)
    ag1 = jnp.dot(a_mat, g1.astype(dot_dtype), preferred_element_type=f32)
    corr = jnp.sum(g1 * ag1, axis=0)
    return ham + 0.5 * h * corr


def init_params(key, input_dim, hidden_dim):
    """Deterministic init in PyTorch Linear layout (out, in); 2 hidden tanh layers."""
    ks = jax.random.split(key, 6)
    s1 = 1.0 / jnp.sqrt(input_dim)
    s2 = 1.0 / jnp.sqrt(hidden_dim)
    W1 = jax.random.uniform(ks[0], (hidden_dim, input_dim), jnp.float32, -s1, s1)
    b1 = jax.random.uniform(ks[1], (hidden_dim,), jnp.float32, -s1, s1)
    W2 = jax.random.uniform(ks[2], (hidden_dim, hidden_dim), jnp.float32, -s2, s2)
    b2 = jax.random.uniform(ks[3], (hidden_dim,), jnp.float32, -s2, s2)
    w3 = jax.random.uniform(ks[4], (1, hidden_dim), jnp.float32, -s2, s2)
    b3 = jax.random.uniform(ks[5], (1,), jnp.float32, -s2, s2)
    return (W1, b1, W2, b2, w3, b3)


if __name__ == "__main__":
    key = jax.random.PRNGKey(0)
    k_x, k_x2, k_p = jax.random.split(key, 3)

    input_dim = 4       # phase space (q, p) with d = 2   -> args.dim
    hidden_dim = 32     # args.hidden_dim
    h_step = 0.1        # scheme step size
    params = init_params(k_p, input_dim, hidden_dim)

    # --- case 1: tiny batch, single grid step, f32 matmuls (exact-algebra check)
    x_small = jax.random.normal(k_x, (8, input_dim), dtype=jnp.float32)
    out_f32 = corrected_hnn_forward(x_small, params, h_step,
                                    dot_dtype=jnp.float32)
    out_f32 = jax.block_until_ready(out_f32)
    ref_f32 = reference_forward_f32(x_small, params, h_step)
    assert out_f32.shape == (8,)
    assert jnp.allclose(out_f32, ref_f32, atol=1e-4, rtol=1e-4), (out_f32, ref_f32)

    # --- case 2: multi-tile grid (min_tiles=2) with batch padding, bf16 matmuls
    batch = 200
    x_big = jax.random.normal(k_x2, (batch, input_dim), dtype=jnp.float32)
    out_bf16 = corrected_hnn_forward(x_big, params, h_step,
                                     dot_dtype=jnp.bfloat16)
    out_bf16 = jax.block_until_ready(out_bf16)
    ref_mirror = reference_forward_mirror(x_big, params, h_step, jnp.bfloat16)
    ref_exact = reference_forward_f32(x_big, params, h_step)
    assert out_bf16.shape == (batch,)
    assert jnp.allclose(out_bf16, ref_mirror, atol=1e-3, rtol=1e-3), (
        float(jnp.max(jnp.abs(out_bf16 - ref_mirror))))
    assert jnp.allclose(out_bf16, ref_exact, atol=5e-2, rtol=5e-2), (
        float(jnp.max(jnp.abs(out_bf16 - ref_exact))))

    print("KERNEL_OK")
</pallas_src>

<mosaic_0001>
module attributes {stable_mosaic.version = 11 : i64} {
  func.func @corrected_hnn_kernel(%arg0: i32, %arg1: memref<4x128xf32, #tpu.memory_space<vmem>>, %arg2: memref<32x4xf32, #tpu.memory_space<vmem>>, %arg3: memref<32x1xf32, #tpu.memory_space<vmem>>, %arg4: memref<32x32xf32, #tpu.memory_space<vmem>>, %arg5: memref<32x1xf32, #tpu.memory_space<vmem>>, %arg6: memref<32x32xf32, #tpu.memory_space<vmem>>, %arg7: memref<32x1xf32, #tpu.memory_space<vmem>>, %arg8: memref<32x32xf32, #tpu.memory_space<vmem>>, %arg9: memref<1xf32, #tpu.memory_space<smem>>, %arg10: memref<1x128xf32, #tpu.memory_space<vmem>>) attributes {dimension_semantics = [#tpu.dimension_semantics<parallel>], iteration_bounds = array<i64: 1>, scalar_prefetch = 0 : i64, scratch_operands = 0 : i64, tpu.core_type = #tpu.core_type<tc>, window_params = [{transform_indices = @transform_0, window_bounds = array<i64: 4, 128>}, {pipeline_mode = #tpu.pipeline_mode<synchronous>, transform_indices = @transform_1, window_bounds = array<i64: 32, 4>}, {pipeline_mode = #tpu.pipeline_mode<synchronous>, transform_indices = @transform_2, window_bounds = array<i64: 32, 1>}, {pipeline_mode = #tpu.pipeline_mode<synchronous>, transform_indices = @transform_3, window_bounds = array<i64: 32, 32>}, {pipeline_mode = #tpu.pipeline_mode<synchronous>, transform_indices = @transform_4, window_bounds = array<i64: 32, 1>}, {pipeline_mode = #tpu.pipeline_mode<synchronous>, transform_indices = @transform_5, window_bounds = array<i64: 32, 32>}, {pipeline_mode = #tpu.pipeline_mode<synchronous>, transform_indices = @transform_6, window_bounds = array<i64: 32, 1>}, {pipeline_mode = #tpu.pipeline_mode<synchronous>, transform_indices = @transform_7, window_bounds = array<i64: 32, 32>}, {transform_indices = @transform_8, window_bounds = array<i64: 1>}, {transform_indices = @transform_9, window_bounds = array<i64: 1, 128>}]} {
    %c0 = arith.constant 0 : index
    %c0_0 = arith.constant 0 : index
    %0 = vector.load %arg1[%c0, %c0_0] : memref<4x128xf32, #tpu.memory_space<vmem>>, vector<4x128xf32>
    %c0_1 = arith.constant 0 : index
    %c0_2 = arith.constant 0 : index
    %1 = vector.load %arg3[%c0_1, %c0_2] : memref<32x1xf32, #tpu.memory_space<vmem>>, vector<32x1xf32>
    %c0_3 = arith.constant 0 : index
    %c0_4 = arith.constant 0 : index
    %2 = vector.load %arg5[%c0_3, %c0_4] : memref<32x1xf32, #tpu.memory_space<vmem>>, vector<32x1xf32>
    %c0_5 = arith.constant 0 : index
    %c0_6 = arith.constant 0 : index
    %3 = vector.load %arg7[%c0_5, %c0_6] : memref<32x1xf32, #tpu.memory_space<vmem>>, vector<32x1xf32>
    %c0_7 = arith.constant 0 : index
    %c0_8 = arith.constant 0 : index
    %4 = vector.load %arg2[%c0_7, %c0_8] : memref<32x4xf32, #tpu.memory_space<vmem>>, vector<32x1xf32>
    %5 = vector.extract_strided_slice %0 {offsets = [0, 0], sizes = [1, 128], strides = [1, 1]} : vector<4x128xf32> to vector<1x128xf32>
    %6 = vector.broadcast %4 : vector<32x1xf32> to vector<32x128xf32>
    %7 = vector.broadcast %5 : vector<1x128xf32> to vector<32x128xf32>
    %8 = arith.mulf %6, %7 : vector<32x128xf32>
    %9 = vector.broadcast %1 : vector<32x1xf32> to vector<32x128xf32>
    %10 = arith.addf %9, %8 : vector<32x128xf32>
    %c0_9 = arith.constant 0 : index
    %c1 = arith.constant 1 : index
    %11 = vector.load %arg2[%c0_9, %c1] : memref<32x4xf32, #tpu.memory_space<vmem>>, vector<32x1xf32>
    %12 = vector.extract_strided_slice %0 {offsets = [1, 0], sizes = [1, 128], strides = [1, 1]} : vector<4x128xf32> to vector<1x128xf32>
    %13 = vector.broadcast %11 : vector<32x1xf32> to vector<32x128xf32>
    %14 = vector.broadcast %12 : vector<1x128xf32> to vector<32x128xf32>
    %15 = arith.mulf %13, %14 : vector<32x128xf32>
    %16 = arith.addf %10, %15 : vector<32x128xf32>
    %c0_10 = arith.constant 0 : index
    %c2 = arith.constant 2 : index
    %17 = vector.load %arg2[%c0_10, %c2] : memref<32x4xf32, #tpu.memory_space<vmem>>, vector<32x1xf32>
    %18 = vector.extract_strided_slice %0 {offsets = [2, 0], sizes = [1, 128], strides = [1, 1]} : vector<4x128xf32> to vector<1x128xf32>
    %19 = vector.broadcast %17 : vector<32x1xf32> to vector<32x128xf32>
    %20 = vector.broadcast %18 : vector<1x128xf32> to vector<32x128xf32>
    %21 = arith.mulf %19, %20 : vector<32x128xf32>
    %22 = arith.addf %16, %21 : vector<32x128xf32>
    %c0_11 = arith.constant 0 : index
    %c3 = arith.constant 3 : index
    %23 = vector.load %arg2[%c0_11, %c3] : memref<32x4xf32, #tpu.memory_space<vmem>>, vector<32x1xf32>
    %24 = vector.extract_strided_slice %0 {offsets = [3, 0], sizes = [1, 128], strides = [1, 1]} : vector<4x128xf32> to vector<1x128xf32>
    %25 = vector.broadcast %23 : vector<32x1xf32> to vector<32x128xf32>
    %26 = vector.broadcast %24 : vector<1x128xf32> to vector<32x128xf32>
    %27 = arith.mulf %25, %26 : vector<32x128xf32>
    %28 = arith.addf %22, %27 : vector<32x128xf32>
    %29 = math.tanh %28 : vector<32x128xf32>
    %c0_12 = arith.constant 0 : index
    %c0_13 = arith.constant 0 : index
    %30 = vector.load %arg4[%c0_12, %c0_13] : memref<32x32xf32, #tpu.memory_space<vmem>>, vector<32x32xf32>
    %cst = arith.constant dense<0.000000e+00> : vector<32x128xf32>
    %31 = tpu.matmul %30, %29, %cst {dimension_numbers = #tpu.dot_dimension_numbers<[1], [0], [0], [1], [0, 0, 1, 1], [], []>} : vector<32x32xf32>, vector<32x128xf32>, vector<32x128xf32> -> vector<32x128xf32>
    %32 = vector.broadcast %2 : vector<32x1xf32> to vector<32x128xf32>
    %33 = arith.addf %31, %32 : vector<32x128xf32>
    %34 = math.tanh %33 : vector<32x128xf32>
    %35 = vector.broadcast %3 : vector<32x1xf32> to vector<32x128xf32>
    %36 = arith.mulf %34, %35 : vector<32x128xf32>
    %cst_14 = arith.constant dense<0.000000e+00> : vector<128xf32>
    %37 = vector.multi_reduction <add>, %36, %cst_14 [0] : vector<32x128xf32> to vector<128xf32>
    %38 = vector.shape_cast %37 : vector<128xf32> to vector<1x128xf32>
    %c0_15 = arith.constant 0 : index
    %39 = memref.load %arg9[%c0_15] : memref<1xf32, #tpu.memory_space<smem>>
    %40 = vector.broadcast %39 : f32 to vector<1x128xf32>
    %41 = arith.addf %38, %40 : vector<1x128xf32>
    %42 = arith.mulf %34, %36 : vector<32x128xf32>
    %43 = vector.broadcast %3 : vector<32x1xf32> to vector<32x128xf32>
    %44 = arith.subf %43, %42 : vector<32x128xf32>
    %c0_16 = arith.constant 0 : index
    %c0_17 = arith.constant 0 : index
    %45 = vector.load %arg6[%c0_16, %c0_17] : memref<32x32xf32, #tpu.memory_space<vmem>>, vector<32x32xf32>
    %cst_18 = arith.constant dense<0.000000e+00> : vector<32x128xf32>
    %46 = tpu.matmul %45, %44, %cst_18 {dimension_numbers = #tpu.dot_dimension_numbers<[1], [0], [0], [1], [0, 0, 1, 1], [], []>} : vector<32x32xf32>, vector<32x128xf32>, vector<32x128xf32> -> vector<32x128xf32>
    %47 = arith.mulf %29, %29 : vector<32x128xf32>
    %cst_19 = arith.constant 1.000000e+00 : f32
    %48 = vector.broadcast %cst_19 : f32 to vector<32x128xf32>
    %49 = arith.subf %48, %47 : vector<32x128xf32>
    %50 = arith.mulf %46, %49 : vector<32x128xf32>
    %c0_20 = arith.constant 0 : index
    %c0_21 = arith.constant 0 : index
    %51 = vector.load %arg8[%c0_20, %c0_21] : memref<32x32xf32, #tpu.memory_space<vmem>>, vector<32x32xf32>
    %cst_22 = arith.constant dense<0.000000e+00> : vector<32x128xf32>
    %52 = tpu.matmul %51, %50, %cst_22 {dimension_numbers = #tpu.dot_dimension_numbers<[1], [0], [0], [1], [0, 0, 1, 1], [], []>} : vector<32x32xf32>, vector<32x128xf32>, vector<32x128xf32> -> vector<32x128xf32>
    %53 = arith.mulf %50, %52 : vector<32x128xf32>
    %cst_23 = arith.constant dense<0.000000e+00> : vector<128xf32>
    %54 = vector.multi_reduction <add>, %53, %cst_23 [0] : vector<32x128xf32> to vector<128xf32>
    %55 = vector.shape_cast %54 : vector<128xf32> to vector<1x128xf32>
    %cst_24 = arith.constant 5.000000e-02 : f32
    %56 = vector.broadcast %cst_24 : f32 to vector<1x128xf32>
    %57 = arith.mulf %56, %55 : vector<1x128xf32>
    %58 = arith.addf %41, %57 : vector<1x128xf32>
    %c0_25 = arith.constant 0 : index
    %c0_26 = arith.constant 0 : index
    %59 = vector.load %arg10[%c0_25, %c0_26] : memref<1x128xf32, #tpu.memory_space<vmem>>, vector<1x128xf32>
    tpu.vector_store %arg10[%c0_25, %c0_26], %58 {strides = array<i32>} : memref<1x128xf32, #tpu.memory_space<vmem>>, vector<1x128xf32>,
    return
  }
  func.func @transform_0(%arg0: i32) -> (i32, i32) {
    %c0_i32 = arith.constant 0 : i32
    %c0_i32_0 = arith.constant 0 : i32
    return %c0_i32, %arg0 : i32, i32
  }
  func.func @transform_1(%arg0: i32) -> (i32, i32) {
    %c0_i32 = arith.constant 0 : i32
    %c0_i32_0 = arith.constant 0 : i32
    %c0_i32_1 = arith.constant 0 : i32
    return %c0_i32, %c0_i32_0 : i32, i32
  }
  func.func @transform_2(%arg0: i32) -> (i32, i32) {
    %c0_i32 = arith.constant 0 : i32
    %c0_i32_0 = arith.constant 0 : i32
    %c0_i32_1 = arith.constant 0 : i32
    return %c0_i32, %c0_i32_0 : i32, i32
  }
  func.func @transform_3(%arg0: i32) -> (i32, i32) {
    %c0_i32 = arith.constant 0 : i32
    %c0_i32_0 = arith.constant 0 : i32
    %c0_i32_1 = arith.constant 0 : i32
    return %c0_i32, %c0_i32_0 : i32, i32
  }
  func.func @transform_4(%arg0: i32) -> (i32, i32) {
    %c0_i32 = arith.constant 0 : i32
    %c0_i32_0 = arith.constant 0 : i32
    %c0_i32_1 = arith.constant 0 : i32
    return %c0_i32, %c0_i32_0 : i32, i32
  }
  func.func @transform_5(%arg0: i32) -> (i32, i32) {
    %c0_i32 = arith.constant 0 : i32
    %c0_i32_0 = arith.constant 0 : i32
    %c0_i32_1 = arith.constant 0 : i32
    return %c0_i32, %c0_i32_0 : i32, i32
  }
  func.func @transform_6(%arg0: i32) -> (i32, i32) {
    %c0_i32 = arith.constant 0 : i32
    %c0_i32_0 = arith.constant 0 : i32
    %c0_i32_1 = arith.constant 0 : i32
    return %c0_i32, %c0_i32_0 : i32, i32
  }
  func.func @transform_7(%arg0: i32) -> (i32, i32) {
    %c0_i32 = arith.constant 0 : i32
    %c0_i32_0 = arith.constant 0 : i32
    %c0_i32_1 = arith.constant 0 : i32
    return %c0_i32, %c0_i32_0 : i32, i32
  }
  func.func @transform_8(%arg0: i32) -> i32 {
    %c0_i32 = arith.constant 0 : i32
    %c0_i32_0 = arith.constant 0 : i32
    return %c0_i32 : i32
  }
  func.func @transform_9(%arg0: i32) -> (i32, i32) {
    %c0_i32 = arith.constant 0 : i32
    %c0_i32_0 = arith.constant 0 : i32
    return %c0_i32, %arg0 : i32, i32
  }
}

</mosaic_0001>

<llo_original>
// kernel: tpu_custom_call.1
$region0: #{tpu_custom_call.1}
  #allocation0 [shape = 'u32[]', space=smem, size = 0x4, offset = 0x4, fixed_abs, tag = 'smem constant byte address 0x4 - core index']
  #allocation1 [shape = 'u32[144,128]{1,0:T(1,128)}', space=vmem, size = 0x12000, scoped, tag = 'internal scratch']
  #allocation2 [shape = 'f32[1]{0:T(128)S(6)}', space=smem, size = 0x200, scoped, tag = 'scoped memory for tpu_custom_call.1']
  %s0 = inlined_call_operand.vmem [shape: f32[4,128], index: 0, kind: input, shape index: {}]
  %s1 = inlined_call_operand.vmem [shape: f32[32,4], index: 1, kind: input, shape index: {}]
  %s2 = inlined_call_operand.vmem [shape: f32[32,1], index: 2, kind: input, shape index: {}]
  %s3 = inlined_call_operand.vmem [shape: f32[32,32], index: 3, kind: input, shape index: {}]
  %s4 = inlined_call_operand.vmem [shape: f32[32,1], index: 4, kind: input, shape index: {}]
  %s5 = inlined_call_operand.vmem [shape: f32[32,32], index: 5, kind: input, shape index: {}]
  %s6 = inlined_call_operand.vmem [shape: f32[32,1], index: 6, kind: input, shape index: {}]
  %s7 = inlined_call_operand.vmem [shape: f32[32,32], index: 7, kind: input, shape index: {}]
  %s8 = inlined_call_operand.<no memory space> [shape: f32[1], index: 8, kind: input, shape index: {}]
  %s9 = inlined_call_operand.hbm [shape: f32[1,128], index: 9, kind: output, shape index: {}]
  %s10 = sld [smem:[#allocation0]]
  $region46: #{tpu_custom_call.1} parent=0
    _
  %s12 = ssub.s32 1, %s10
  %s13 = scalar_select 0, %s12, %s10
  %14 = sst [smem:[#allocation2]] %s8
  $region1: #{tpu_custom_call.1} parent=0
    #allocation3 [shape = 'u8[512]{0}', space=vmem, size = 0x400, scoped, tag = 'output window, operand 0, single buffered']
    #allocation4 [shape = 's32[1]{0}', space=sflag, size = 0x4, scoped, tag = 'scoped memory for tpu_custom_call.1']
    %15 = vsyncpa [#allocation4], 0
    // Predicated region
    $region2: #{tpu_custom_call.1} parent=1 // pred_check
      _
    $region3: #{tpu_custom_call.1} parent=1 // pred_check_branch
      %17 = sbr.rel (0) target = $region5
    $region4: #{tpu_custom_call.1} parent=1 // pred_region
      _
    $region5: #{tpu_custom_call.1} parent=1 // pred_fallthru
      _
    // Predicated region
    $region6: #{tpu_custom_call.1} parent=1 // pred_check
      _
    $region7: #{tpu_custom_call.1} parent=1 // pred_check_branch
      %19 = sbr.rel (0) target = $region9
    $region8: #{tpu_custom_call.1} parent=1 // pred_region
      _
    $region9: #{tpu_custom_call.1} parent=1 // pred_fallthru
      _
    // Predicated region
    $region10: #{tpu_custom_call.1} parent=1 // pred_check
      _
    $region11: #{tpu_custom_call.1} parent=1 // pred_check_branch
      %21 = sbr.rel (0) target = $region13
    $region12: #{tpu_custom_call.1} parent=1 // pred_region
      _
    $region13: #{tpu_custom_call.1} parent=1 // pred_fallthru
      _
    // Predicated region
    $region14: #{tpu_custom_call.1} parent=1 // pred_check
      _
    $region15: #{tpu_custom_call.1} parent=1 // pred_check_branch
      %23 = sbr.rel (0) target = $region17
    $region16: #{tpu_custom_call.1} parent=1 // pred_region
      _
    $region17: #{tpu_custom_call.1} parent=1 // pred_fallthru
      _
    // Predicated region
    $region18: #{tpu_custom_call.1} parent=1 // pred_check
      _
    $region19: #{tpu_custom_call.1} parent=1 // pred_check_branch
      %25 = sbr.rel (0) target = $region21
    $region20: #{tpu_custom_call.1} parent=1 // pred_region
      _
    $region21: #{tpu_custom_call.1} parent=1 // pred_fallthru
      _
    // Predicated region
    $region22: #{tpu_custom_call.1} parent=1 // pred_check
      _
    $region23: #{tpu_custom_call.1} parent=1 // pred_check_branch
      %27 = sbr.rel (0) target = $region25
    $region24: #{tpu_custom_call.1} parent=1 // pred_region
      _
    $region25: #{tpu_custom_call.1} parent=1 // pred_fallthru
      _
    // Predicated region
    $region26: #{tpu_custom_call.1} parent=1 // pred_check
      _
    $region27: #{tpu_custom_call.1} parent=1 // pred_check_branch
      %29 = sbr.rel (0) target = $region29
    $region28: #{tpu_custom_call.1} parent=1 // pred_region
      _
    $region29: #{tpu_custom_call.1} parent=1 // pred_fallthru
      _
    // Predicated region
    $region30: #{tpu_custom_call.1} parent=1 // pred_check
      _
    $region31: #{tpu_custom_call.1} parent=1 // pred_check_branch
      %31 = sbr.rel (0) target = $region33
    $region32: #{tpu_custom_call.1} parent=1 // pred_region
      _
    $region33: #{tpu_custom_call.1} parent=1 // pred_fallthru
      _
    // Predicated region
    $region34: #{tpu_custom_call.1} parent=1 // pred_check
      _
    $region35: #{tpu_custom_call.1} parent=1 // pred_check_branch
      %33 = sbr.rel (0) target = $region37
    $region36: #{tpu_custom_call.1} parent=1 // pred_region
      _
    $region37: #{tpu_custom_call.1} parent=1 // pred_fallthru
      _
    %v34 = vld [vmem:[%s0] sm:$0xf]
    %v35 = vld [vmem:[%s2] sm:$0xff]
    %v36 = vld [vmem:[%s2 + $0x8] sm:$0xff]
    %v37 = vld [vmem:[%s2 + $0x10] sm:$0xff]
    %v38 = vld [vmem:[%s2 + $0x18] sm:$0xff]
    %v39 = vld [vmem:[%s4] sm:$0xff]
    %v40 = vld [vmem:[%s4 + $0x8] sm:$0xff]
    %v41 = vld [vmem:[%s4 + $0x10] sm:$0xff]
    %v42 = vld [vmem:[%s4 + $0x18] sm:$0xff]
    %v43 = vld [vmem:[%s6] sm:$0xff]
    %v44 = vld [vmem:[%s6 + $0x8] sm:$0xff]
    %v45 = vld [vmem:[%s6 + $0x10] sm:$0xff]
    %v46 = vld [vmem:[%s6 + $0x18] sm:$0xff]
    %v47 = vld [vmem:[%s1] sm:$0xff]
    %v48 = vld [vmem:[%s1 + $0x8] sm:$0xff]
    %v49 = vld [vmem:[%s1 + $0x10] sm:$0xff]
    %v50 = vld [vmem:[%s1 + $0x18] sm:$0xff]
    %52 = vset.pattern.permute.xlu0 0
    %53 = vperm.xlu0 %52, %v47
    %v54 = vpop.permute.xlu0 %53
    %57 = vset.pattern.permute.xlu0 0
    %58 = vperm.xlu0 %57, %v48
    %v59 = vpop.permute.xlu0 %58
    %62 = vset.pattern.permute.xlu0 0
    %63 = vperm.xlu0 %62, %v49
    %v64 = vpop.permute.xlu0 %63
    %67 = vset.pattern.permute.xlu0 0
    %68 = vperm.xlu0 %67, %v50
    %v69 = vpop.permute.xlu0 %68
    %v71 = vlaneseq
    %v72 = vshrl.u32 %v71, 7
    %v73 = vsub.s32 0, %v72
    %v74 = vrot.slane %v34, %v73
    %v75 = vmul.f32 %v54, %v74
    %v76 = vmul.f32 %v59, %v74
    %v77 = vmul.f32 %v64, %v74
    %v78 = vmul.f32 %v69, %v74
    %80 = vset.pattern.permute.xlu0 0
    %81 = vperm.xlu0 %80, %v35
    %v82 = vpop.permute.xlu0 %81
    %85 = vset.pattern.permute.xlu0 0
    %86 = vperm.xlu0 %85, %v36
    %v87 = vpop.permute.xlu0 %86
    %90 = vset.pattern.permute.xlu0 0
    %91 = vperm.xlu0 %90, %v37
    %v92 = vpop.permute.xlu0 %91
    %95 = vset.pattern.permute.xlu0 0
    %96 = vperm.xlu0 %95, %v38
    %v97 = vpop.permute.xlu0 %96
    %v99 = vadd.f32 %v82, %v75
    %v100 = vadd.f32 %v87, %v76
    %v101 = vadd.f32 %v92, %v77
    %v102 = vadd.f32 %v97, %v78
    %103 = vset.pattern.permute.xlu0 1
    %104 = vperm.xlu0 %103, %v47
    %v105 = vpop.permute.xlu0 %104
    %107 = vset.pattern.permute.xlu0 1
    %108 = vperm.xlu0 %107, %v48
    %v109 = vpop.permute.xlu0 %108
    %111 = vset.pattern.permute.xlu0 1
    %112 = vperm.xlu0 %111, %v49
    %v113 = vpop.permute.xlu0 %112
    %115 = vset.pattern.permute.xlu0 1
    %116 = vperm.xlu0 %115, %v50
    %v117 = vpop.permute.xlu0 %116
    %v119 = vlaneseq
    %v120 = vshrl.u32 %v119, 7
    %v121 = vsub.s32 1, %v120
    %v122 = vrot.slane %v34, %v121
    %v123 = vmul.f32 %v105, %v122
    %v124 = vmul.f32 %v109, %v122
    %v125 = vmul.f32 %v113, %v122
    %v126 = vmul.f32 %v117, %v122
    %v127 = vadd.f32 %v99, %v123
    %v128 = vadd.f32 %v100, %v124
    %v129 = vadd.f32 %v101, %v125
    %v130 = vadd.f32 %v102, %v126
    %131 = vset.pattern.permute.xlu0 2
    %132 = vperm.xlu0 %131, %v47
    %v133 = vpop.permute.xlu0 %132
    %135 = vset.pattern.permute.xlu0 2
    %136 = vperm.xlu0 %135, %v48
    %v137 = vpop.permute.xlu0 %136
    %139 = vset.pattern.permute.xlu0 2
    %140 = vperm.xlu0 %139, %v49
    %v141 = vpop.permute.xlu0 %140
    %143 = vset.pattern.permute.xlu0 2
    %144 = vperm.xlu0 %143, %v50
    %v145 = vpop.permute.xlu0 %144
    %v147 = vlaneseq
    %v148 = vshrl.u32 %v147, 7
    %v149 = vsub.s32 2, %v148
    %v150 = vrot.slane %v34, %v149
    %v151 = vmul.f32 %v133, %v150
    %v152 = vmul.f32 %v137, %v150
    %v153 = vmul.f32 %v141, %v150
    %v154 = vmul.f32 %v145, %v150
    %v155 = vadd.f32 %v127, %v151
    %v156 = vadd.f32 %v128, %v152
    %v157 = vadd.f32 %v129, %v153
    %v158 = vadd.f32 %v130, %v154
    %159 = vset.pattern.permute.xlu0 3
    %160 = vperm.xlu0 %159, %v47
    %v161 = vpop.permute.xlu0 %160
    %163 = vset.pattern.permute.xlu0 3
    %164 = vperm.xlu0 %163, %v48
    %v165 = vpop.permute.xlu0 %164
    %167 = vset.pattern.permute.xlu0 3
    %168 = vperm.xlu0 %167, %v49
    %v169 = vpop.permute.xlu0 %168
    %171 = vset.pattern.permute.xlu0 3
    %172 = vperm.xlu0 %171, %v50
    %v173 = vpop.permute.xlu0 %172
    %v175 = vlaneseq
    %v176 = vshrl.u32 %v175, 7
    %v177 = vsub.s32 3, %v176
    %v178 = vrot.slane %v34, %v177
    %v179 = vmul.f32 %v161, %v178
    %v180 = vmul.f32 %v165, %v178
    %v181 = vmul.f32 %v169, %v178
    %v182 = vmul.f32 %v173, %v178
    %v183 = vadd.f32 %v155, %v179
    %v184 = vadd.f32 %v156, %v180
    %v185 = vadd.f32 %v157, %v181
    %v186 = vadd.f32 %v158, %v182
    %v187 = vtanh.pop %v183
    %v188 = vtanh.pop %v184
    %v189 = vtanh.pop %v185
    %v190 = vtanh.pop %v186
    %v191 = vld [vmem:[%s3] sm:$0xff]
    %v192 = vld [vmem:[%s3 + $0x8] sm:$0xff]
    %v193 = vld [vmem:[%s3 + $0x10] sm:$0xff]
    %v194 = vld [vmem:[%s3 + $0x18] sm:$0xff]
    %196 = vset.pattern.permute.xlu0 0
    %197 = vperm.xlu0 %196, %v39
    %v198 = vpop.permute.xlu0 %197
    %201 = vset.pattern.permute.xlu0 0
    %202 = vperm.xlu0 %201, %v40
    %v203 = vpop.permute.xlu0 %202
    %206 = vset.pattern.permute.xlu0 0
    %207 = vperm.xlu0 %206, %v41
    %v208 = vpop.permute.xlu0 %207
    %211 = vset.pattern.permute.xlu0 0
    %212 = vperm.xlu0 %211, %v42
    %v213 = vpop.permute.xlu0 %212
    %vm215 = vcmask 261120
    %v217 = vsel %vm215, %v191, 0
    %v220 = vsel %vm215, %v192, 0
    %v223 = vsel %vm215, %v193, 0
    %v226 = vsel %vm215, %v194, 0
    %228 = vmatprep.subr.mxu0 0.0
    %229 = vmatpush1.msra.mxu0 %v187
    %230 = vmatprep.subr.mxu0 0.0
    %231 = vmatpush1.msra.mxu0 %v188
    %232 = vmatprep.subr.mxu0 0.0
    %233 = vmatpush1.msra.mxu0 %v189
    %234 = vmatprep.subr.mxu0 0.0
    %235 = vmatpush1.msra.mxu0 %v190
    %236 = vmatprep.subr.mxu0 0.0
    %237 = vmatpush1.msra.mxu0 0.0
    %238 = vmatprep.subr.mxu0 0.0
    %239 = vmatpush1.msra.mxu0 0.0
    %240 = vmatprep.subr.mxu0 0.0
    %241 = vmatpush1.msra.mxu0 0.0
    %242 = vmatprep.subr.mxu0 0.0
    %243 = vmatpush1.msra.mxu0 0.0
    %244 = vmatprep.subr.mxu0 0.0
    %245 = vmatpush1.msra.mxu0 0.0
    %246 = vmatprep.subr.mxu0 0.0
    %247 = vmatpush1.msra.mxu0 0.0
    %248 = vmatprep.subr.mxu0 0.0
    %249 = vmatpush1.msra.mxu0 0.0
    %250 = vmatprep.subr.mxu0 0.0
    %251 = vmatpush1.msra.mxu0 0.0
    %252 = vmatprep.subr.mxu0 0.0
    %253 = vmatpush1.msra.mxu0 0.0
    %254 = vmatprep.subr.mxu0 0.0
    %255 = vmatpush1.msra.mxu0 0.0
    %256 = vmatprep.subr.mxu0 0.0
    %257 = vmatpush1.msra.mxu0 0.0
    %258 = vmatprep.subr.mxu0 0.0
    %259 = vmatpush1.msra.mxu0 0.0
    %260 = vmatprep.subr.mxu0 0.0
    %261 = vmatpush1.msra.mxu0 0.0
    %262 = vmatprep.subr.mxu0 0.0
    %263 = vmatpush1.msra.mxu0 0.0
    %264 = vmatprep.subr.mxu0 0.0
    %265 = vmatpush1.msra.mxu0 0.0
    %266 = vmatprep.subr.mxu0 0.0
    %267 = vmatpush1.msra.mxu0 0.0
    %268 = vmatprep.subr.mxu0 0.0
    %269 = vmatpush1.msra.mxu0 0.0
    %270 = vmatprep.subr.mxu0 0.0
    %271 = vmatpush1.msra.mxu0 0.0
    %272 = vmatprep.subr.mxu0 0.0
    %273 = vmatpush1.msra.mxu0 0.0
    %274 = vmatprep.subr.mxu0 0.0
    %275 = vmatpush1.msra.mxu0 0.0
    %276 = vmatprep.subr.mxu0 0.0
    %277 = vmatpush1.msra.mxu0 0.0
    %278 = vmatprep.subr.mxu0 0.0
    %279 = vmatpush1.msra.mxu0 0.0
    %280 = vmatprep.subr.mxu0 0.0
    %281 = vmatpush1.msra.mxu0 0.0
    %282 = vmatprep.subr.mxu0 0.0
    %283 = vmatpush1.msra.mxu0 0.0
    %284 = vmatprep.subr.mxu0 0.0
    %285 = vmatpush1.msra.mxu0 0.0
    %286 = vmatprep.subr.mxu0 0.0
    %287 = vmatpush1.msra.mxu0 0.0
    %288 = vmatprep.subr.mxu0 0.0
    %289 = vmatpush1.msra.mxu0 0.0
    %290 = vmatprep.subr.mxu0 0.0
    %291 = vmatpush1.msra.mxu0 0.0
    %292 = vmatprep.mubr.f32.mxu0 0.0
    %293 = vmatmul.mubr.f32.gmra.mrb[0].mxu0 %v217
    %v294 = vpop.f32.mrb[0].mxu0
    %v295 = vadd.f32 %v198, %v294
    %v296 = vpop.f32.mrb[0].mxu0
    %297 = vmatprep.mubr.f32.mxu0 0.0
    %298 = vmatmul.mubr.f32.gmra.mrb[0].mxu0 %v220
    %v299 = vpop.f32.mrb[0].mxu0
    %v300 = vadd.f32 %v203, %v299
    %v301 = vpop.f32.mrb[0].mxu0
    %302 = vmatprep.mubr.f32.mxu0 0.0
    %303 = vmatmul.mubr.f32.gmra.mrb[0].mxu0 %v223
    %v304 = vpop.f32.mrb[0].mxu0
    %v305 = vadd.f32 %v208, %v304
    %v306 = vpop.f32.mrb[0].mxu0
    %307 = vmatprep.mubr.f32.mxu0 0.0
    %308 = vmatmul.mubr.f32.gmra.mrb[0].mxu0 %v226
    %v309 = vpop.f32.mrb[0].mxu0
    %v310 = vadd.f32 %v213, %v309
    %v311 = vpop.f32.mrb[0].mxu0
    %312 = vdwg.mxu0
    %v313 = vtanh.pop %v295
    %v314 = vtanh.pop %v300
    %v315 = vtanh.pop %v305
    %v316 = vtanh.pop %v310
    %318 = vset.pattern.permute.xlu0 0
    %319 = vperm.xlu0 %318, %v43
    %v320 = vpop.permute.xlu0 %319
    %323 = vset.pattern.permute.xlu0 0
    %324 = vperm.xlu0 %323, %v44
    %v325 = vpop.permute.xlu0 %324
    %328 = vset.pattern.permute.xlu0 0
    %329 = vperm.xlu0 %328, %v45
    %v330 = vpop.permute.xlu0 %329
    %333 = vset.pattern.permute.xlu0 0
    %334 = vperm.xlu0 %333, %v46
    %v335 = vpop.permute.xlu0 %334
    %v337 = vmul.f32 %v313, %v320
    %v338 = vmul.f32 %v314, %v325
    %v339 = vmul.f32 %v315, %v330
    %v340 = vmul.f32 %v316, %v335
    %v341 = vadd.f32 %v337, %v338
    %v342 = vadd.f32 %v341, %v339
    %v343 = vadd.f32 %v342, %v340
    %v344 = vrot.slane %v343, 4
    %v345 = vadd.f32 %v343, %v344
    %v346 = vrot.slane %v345, 2
    %v347 = vadd.f32 %v345, %v346
    %v348 = vrot.slane %v347, 1
    %v349 = vadd.f32 %v347, %v348
    %s350 = sld [smem:[#allocation2]]
    %v351 = vstv %s350
    %v352 = vadd.f32 %v349, %v351
    %v353 = vmul.f32 %v313, %v337
    %v354 = vmul.f32 %v314, %v338
    %v355 = vmul.f32 %v315, %v339
    %v356 = vmul.f32 %v316, %v340
    %v357 = vsub.f32 %v320, %v353
    %v358 = vsub.f32 %v325, %v354
    %v359 = vsub.f32 %v330, %v355
    %v360 = vsub.f32 %v335, %v356
    %v361 = vld [vmem:[%s5] sm:$0xff]
    %v362 = vld [vmem:[%s5 + $0x8] sm:$0xff]
    %v363 = vld [vmem:[%s5 + $0x10] sm:$0xff]
    %v364 = vld [vmem:[%s5 + $0x18] sm:$0xff]
    %v366 = vsel %vm215, %v361, 0
    %v369 = vsel %vm215, %v362, 0
    %v372 = vsel %vm215, %v363, 0
    %v375 = vsel %vm215, %v364, 0
    %377 = vmatprep.subr.mxu0 0.0
    %378 = vmatpush1.msra.mxu0 %v357
    %379 = vmatprep.subr.mxu0 0.0
    %380 = vmatpush1.msra.mxu0 %v358
    %381 = vmatprep.subr.mxu0 0.0
    %382 = vmatpush1.msra.mxu0 %v359
    %383 = vmatprep.subr.mxu0 0.0
    %384 = vmatpush1.msra.mxu0 %v360
    %385 = vmatprep.subr.mxu0 0.0
    %386 = vmatpush1.msra.mxu0 0.0
    %387 = vmatprep.subr.mxu0 0.0
    %388 = vmatpush1.msra.mxu0 0.0
    %389 = vmatprep.subr.mxu0 0.0
    %390 = vmatpush1.msra.mxu0 0.0
    %391 = vmatprep.subr.mxu0 0.0
    %392 = vmatpush1.msra.mxu0 0.0
    %393 = vmatprep.subr.mxu0 0.0
    %394 = vmatpush1.msra.mxu0 0.0
    %395 = vmatprep.subr.mxu0 0.0
    %396 = vmatpush1.msra.mxu0 0.0
    %397 = vmatprep.subr.mxu0 0.0
    %398 = vmatpush1.msra.mxu0 0.0
    %399 = vmatprep.subr.mxu0 0.0
    %400 = vmatpush1.msra.mxu0 0.0
    %401 = vmatprep.subr.mxu0 0.0
    %402 = vmatpush1.msra.mxu0 0.0
    %403 = vmatprep.subr.mxu0 0.0
    %404 = vmatpush1.msra.mxu0 0.0
    %405 = vmatprep.subr.mxu0 0.0
    %406 = vmatpush1.msra.mxu0 0.0
    %407 = vmatprep.subr.mxu0 0.0
    %408 = vmatpush1.msra.mxu0 0.0
    %409 = vmatprep.subr.mxu0 0.0
    %410 = vmatpush1.msra.mxu0 0.0
    %411 = vmatprep.subr.mxu0 0.0
    %412 = vmatpush1.msra.mxu0 0.0
    %413 = vmatprep.subr.mxu0 0.0
    %414 = vmatpush1.msra.mxu0 0.0
    %415 = vmatprep.subr.mxu0 0.0
    %416 = vmatpush1.msra.mxu0 0.0
    %417 = vmatprep.subr.mxu0 0.0
    %418 = vmatpush1.msra.mxu0 0.0
    %419 = vmatprep.subr.mxu0 0.0
    %420 = vmatpush1.msra.mxu0 0.0
    %421 = vmatprep.subr.mxu0 0.0
    %422 = vmatpush1.msra.mxu0 0.0
    %423 = vmatprep.subr.mxu0 0.0
    %424 = vmatpush1.msra.mxu0 0.0
    %425 = vmatprep.subr.mxu0 0.0
    %426 = vmatpush1.msra.mxu0 0.0
    %427 = vmatprep.subr.mxu0 0.0
    %428 = vmatpush1.msra.mxu0 0.0
    %429 = vmatprep.subr.mxu0 0.0
    %430 = vmatpush1.msra.mxu0 0.0
    %431 = vmatprep.subr.mxu0 0.0
    %432 = vmatpush1.msra.mxu0 0.0
    %433 = vmatprep.subr.mxu0 0.0
    %434 = vmatpush1.msra.mxu0 0.0
    %435 = vmatprep.subr.mxu0 0.0
    %436 = vmatpush1.msra.mxu0 0.0
    %437 = vmatprep.subr.mxu0 0.0
    %438 = vmatpush1.msra.mxu0 0.0
    %439 = vmatprep.subr.mxu0 0.0
    %440 = vmatpush1.msra.mxu0 0.0
    %441 = vmatprep.mubr.f32.mxu0 0.0
    %442 = vmatmul.mubr.f32.gmra.mrb[0].mxu0 %v366
    %v443 = vpop.f32.mrb[0].mxu0
    %v444 = vadd.f32 0.0, %v443
    %v445 = vpop.f32.mrb[0].mxu0
    %446 = vmatprep.mubr.f32.mxu0 0.0
    %447 = vmatmul.mubr.f32.gmra.mrb[0].mxu0 %v369
    %v448 = vpop.f32.mrb[0].mxu0
    %v449 = vadd.f32 0.0, %v448
    %v450 = vpop.f32.mrb[0].mxu0
    %451 = vmatprep.mubr.f32.mxu0 0.0
    %452 = vmatmul.mubr.f32.gmra.mrb[0].mxu0 %v372
    %v453 = vpop.f32.mrb[0].mxu0
    %v454 = vadd.f32 0.0, %v453
    %v455 = vpop.f32.mrb[0].mxu0
    %456 = vmatprep.mubr.f32.mxu0 0.0
    %457 = vmatmul.mubr.f32.gmra.mrb[0].mxu0 %v375
    %v458 = vpop.f32.mrb[0].mxu0
    %v459 = vadd.f32 0.0, %v458
    %v460 = vpop.f32.mrb[0].mxu0
    %461 = vdwg.mxu0
    %v462 = vmul.f32 %v187, %v187
    %v463 = vmul.f32 %v188, %v188
    %v464 = vmul.f32 %v189, %v189
    %v465 = vmul.f32 %v190, %v190
    %v466 = vsub.f32 1.0, %v462
    %v467 = vsub.f32 1.0, %v463
    %v468 = vsub.f32 1.0, %v464
    %v469 = vsub.f32 1.0, %v465
    %v470 = vmul.f32 %v444, %v466
    %v471 = vmul.f32 %v449, %v467
    %v472 = vmul.f32 %v454, %v468
    %v473 = vmul.f32 %v459, %v469
    %v474 = vld [vmem:[%s7] sm:$0xff]
    %v475 = vld [vmem:[%s7 + $0x8] sm:$0xff]
    %v476 = vld [vmem:[%s7 + $0x10] sm:$0xff]
    %v477 = vld [vmem:[%s7 + $0x18] sm:$0xff]
    %v479 = vsel %vm215, %v474, 0
    %v482 = vsel %vm215, %v475, 0
    %v485 = vsel %vm215, %v476, 0
    %v488 = vsel %vm215, %v477, 0
    %490 = vmatprep.subr.mxu0 0.0
    %491 = vmatpush1.msra.mxu0 %v470
    %492 = vmatprep.subr.mxu0 0.0
    %493 = vmatpush1.msra.mxu0 %v471
    %494 = vmatprep.subr.mxu0 0.0
    %495 = vmatpush1.msra.mxu0 %v472
    %496 = vmatprep.subr.mxu0 0.0
    %497 = vmatpush1.msra.mxu0 %v473
    %498 = vmatprep.subr.mxu0 0.0
    %499 = vmatpush1.msra.mxu0 0.0
    %500 = vmatprep.subr.mxu0 0.0
    %501 = vmatpush1.msra.mxu0 0.0
    %502 = vmatprep.subr.mxu0 0.0
    %503 = vmatpush1.msra.mxu0 0.0
    %504 = vmatprep.subr.mxu0 0.0
    %505 = vmatpush1.msra.mxu0 0.0
    %506 = vmatprep.subr.mxu0 0.0
    %507 = vmatpush1.msra.mxu0 0.0
    %508 = vmatprep.subr.mxu0 0.0
    %509 = vmatpush1.msra.mxu0 0.0
    %510 = vmatprep.subr.mxu0 0.0
    %511 = vmatpush1.msra.mxu0 0.0
    %512 = vmatprep.subr.mxu0 0.0
    %513 = vmatpush1.msra.mxu0 0.0
    %514 = vmatprep.subr.mxu0 0.0
    %515 = vmatpush1.msra.mxu0 0.0
    %516 = vmatprep.subr.mxu0 0.0
    %517 = vmatpush1.msra.mxu0 0.0
    %518 = vmatprep.subr.mxu0 0.0
    %519 = vmatpush1.msra.mxu0 0.0
    %520 = vmatprep.subr.mxu0 0.0
    %521 = vmatpush1.msra.mxu0 0.0
    %522 = vmatprep.subr.mxu0 0.0
    %523 = vmatpush1.msra.mxu0 0.0
    %524 = vmatprep.subr.mxu0 0.0
    %525 = vmatpush1.msra.mxu0 0.0
    %526 = vmatprep.subr.mxu0 0.0
    %527 = vmatpush1.msra.mxu0 0.0
    %528 = vmatprep.subr.mxu0 0.0
    %529 = vmatpush1.msra.mxu0 0.0
    %530 = vmatprep.subr.mxu0 0.0
    %531 = vmatpush1.msra.mxu0 0.0
    %532 = vmatprep.subr.mxu0 0.0
    %533 = vmatpush1.msra.mxu0 0.0
    %534 = vmatprep.subr.mxu0 0.0
    %535 = vmatpush1.msra.mxu0 0.0
    %536 = vmatprep.subr.mxu0 0.0
    %537 = vmatpush1.msra.mxu0 0.0
    %538 = vmatprep.subr.mxu0 0.0
    %539 = vmatpush1.msra.mxu0 0.0
    %540 = vmatprep.subr.mxu0 0.0
    %541 = vmatpush1.msra.mxu0 0.0
    %542 = vmatprep.subr.mxu0 0.0
    %543 = vmatpush1.msra.mxu0 0.0
    %544 = vmatprep.subr.mxu0 0.0
    %545 = vmatpush1.msra.mxu0 0.0
    %546 = vmatprep.subr.mxu0 0.0
    %547 = vmatpush1.msra.mxu0 0.0
    %548 = vmatprep.subr.mxu0 0.0
    %549 = vmatpush1.msra.mxu0 0.0
    %550 = vmatprep.subr.mxu0 0.0
    %551 = vmatpush1.msra.mxu0 0.0
    %552 = vmatprep.subr.mxu0 0.0
    %553 = vmatpush1.msra.mxu0 0.0
    %554 = vmatprep.mubr.f32.mxu0 0.0
    %555 = vmatmul.mubr.f32.gmra.mrb[0].mxu0 %v479
    %v556 = vpop.f32.mrb[0].mxu0
    %v557 = vadd.f32 0.0, %v556
    %v558 = vpop.f32.mrb[0].mxu0
    %559 = vmatprep.mubr.f32.mxu0 0.0
    %560 = vmatmul.mubr.f32.gmra.mrb[0].mxu0 %v482
    %v561 = vpop.f32.mrb[0].mxu0
    %v562 = vadd.f32 0.0, %v561
    %v563 = vpop.f32.mrb[0].mxu0
    %564 = vmatprep.mubr.f32.mxu0 0.0
    %565 = vmatmul.mubr.f32.gmra.mrb[0].mxu0 %v485
    %v566 = vpop.f32.mrb[0].mxu0
    %v567 = vadd.f32 0.0, %v566
    %v568 = vpop.f32.mrb[0].mxu0
    %569 = vmatprep.mubr.f32.mxu0 0.0
    %570 = vmatmul.mubr.f32.gmra.mrb[0].mxu0 %v488
    %v571 = vpop.f32.mrb[0].mxu0
    %v572 = vadd.f32 0.0, %v571
    %v573 = vpop.f32.mrb[0].mxu0
    %574 = vdwg.mxu0
    %v575 = vmul.f32 %v470, %v557
    %v576 = vmul.f32 %v471, %v562
    %v577 = vmul.f32 %v472, %v567
    %v578 = vmul.f32 %v473, %v572
    %v579 = vadd.f32 %v575, %v576
    %v580 = vadd.f32 %v579, %v577
    %v581 = vadd.f32 %v580, %v578
    %v582 = vrot.slane %v581, 4
    %v583 = vadd.f32 %v581, %v582
    %v584 = vrot.slane %v583, 2
    %v585 = vadd.f32 %v583, %v584
    %v586 = vrot.slane %v585, 1
    %v587 = vadd.f32 %v585, %v586
    %v588 = vmul.f32 %v587, 0.05
    %v589 = vadd.f32 %v352, %v588
    %590 = vst [vmem:[#allocation3] sm:$0x1] %v589
    // Predicated region
    $region38: #{tpu_custom_call.1} parent=1 // pred_check
      _
    $region39: #{tpu_custom_call.1} parent=1 // pred_check_branch
      %592 = sbr.rel (0) target = $region41
    $region40: #{tpu_custom_call.1} parent=1 // pred_region
      %s594 = ssub.s32 16, 16
      %595 = vsyncadd [#allocation4], %s594
      %s597 = sshll.u32 [#allocation3], 4
      %s598 = int_to_ptr.vmem [resolvable:$true] %s597
      %600 = dma.vmem_to_hbm [thread:$0]  %s598, 16, %s9, [#allocation4]
    $region41: #{tpu_custom_call.1} parent=1 // pred_fallthru
      _
    // Predicated region
    $region42: #{tpu_custom_call.1} parent=1 // pred_check
      _
    $region43: #{tpu_custom_call.1} parent=1 // pred_check_branch
      %602 = sbr.rel (0) target = $region45
    $region44: #{tpu_custom_call.1} parent=1 // pred_region
      %603 = dma.done [#allocation4], 16
    $region45: #{tpu_custom_call.1} parent=1 // pred_fallthru
      _
    %604 = vsyncpa [#allocation4], 1

</llo_original>
